<compile_context>
chip_gen: v7x
topology: tpu7x:2x2x1
jax: 0.10.0
libtpu: 0.0.40
codegen_flags: <defaults>
</compile_context>

<pallas_src>
import functools

import jax
import jax.numpy as jnp
from jax import lax
from jax.experimental import pallas as pl
from jax.experimental.pallas import tpu as pltpu


def _round_up(v, m):
    return ((v + m - 1) // m) * m


# ----------------------------------------------------------------------------
# Pallas kernel: out = [relu]( LayerNorm( x @ W + b ) )   (flags are static)
# ----------------------------------------------------------------------------
def _layer_base_kernel(x_ref, w_ref, b_ref, g_ref, beta_ref, o_ref, *,
                       eps, is_norm, is_relu, matmul_dtype):
    # x_ref    : (TM, Cin)   -- row tile of the flattened input
    # w_ref    : (Cin, Cout) -- Linear weight (torch weight transposed: in x out)
    # b_ref    : (1, Cout)   -- Linear bias
    # g_ref    : (1, Cout)   -- LayerNorm gamma
    # beta_ref : (1, Cout)   -- LayerNorm beta
    # o_ref    : (TM, Cout)
    x = x_ref[...]
    if matmul_dtype is not None and x.dtype != jnp.dtype(matmul_dtype):
        # In-kernel operand cast (VALU work hidden under DMA); avoids a
        # separate wrapper-side HBM read+write pass over x.
        x = x.astype(matmul_dtype)

    y = jnp.dot(x, w_ref[...], preferred_element_type=jnp.float32)
    y = y + b_ref[...].astype(jnp.float32)

    if is_norm:
        # One-pass stats: var = E[y^2] - mu^2, all in f32 (per row).
        mu = jnp.mean(y, axis=-1, keepdims=True)
        msq = jnp.mean(y * y, axis=-1, keepdims=True)
        var = jnp.maximum(msq - mu * mu, 0.0)
        inv = lax.rsqrt(var + eps)
        y = (y - mu) * inv * g_ref[...].astype(jnp.float32) \
            + beta_ref[...].astype(jnp.float32)
    if is_relu:
        y = jnp.maximum(y, 0.0)

    # Rows of the last (partial) block past M may hold garbage -> any NaN/inf
    # they produce stays in those rows and their stores are OOB-masked.
    o_ref[...] = y.astype(o_ref.dtype)


# ----------------------------------------------------------------------------
# Module-equivalent forward
# ----------------------------------------------------------------------------
def layer_base_forward(x, params, *, is_norm=True, is_relu=False, is_drop=False,
                       eps=1e-5, tile_m=2048, matmul_dtype=None,
                       out_dtype=jnp.float32):
    """x: (..., Cin). params: w (Cin, Cout) == torch weight.T, b/gamma/beta (Cout,)."""
    w = params["w"]
    b = params["b"]
    Cin, Cout = w.shape
    gamma = params.get("gamma", jnp.ones((Cout,), jnp.float32))
    beta = params.get("beta", jnp.zeros((Cout,), jnp.float32))

    lead = x.shape[:-1]
    x2 = x.reshape(-1, Cin)
    M = x2.shape[0]                       # static Python int

    # Tile selection (all static): big tiles amortize per-step overhead, but
    # keep >= MIN_TILES grid steps so v7x's 2 TensorCores both get work.
    MIN_TILES = 8
    tm = min(tile_m, max(8, _round_up(pl.cdiv(M, MIN_TILES), 8)))
    tm = max(8, min(tm, _round_up(M, 8)))
    n_tiles = pl.cdiv(M, tm)              # ragged tail handled by OOB masking

    # Cast only the tiny weight in the wrapper (one-time ~KiB op).
    if matmul_dtype is not None:
        w = w.astype(matmul_dtype)

    b2 = b.reshape(1, Cout).astype(jnp.float32)
    g2 = gamma.reshape(1, Cout).astype(jnp.float32)
    bt2 = beta.reshape(1, Cout).astype(jnp.float32)

    kernel = functools.partial(_layer_base_kernel, eps=eps, is_norm=is_norm,
                               is_relu=is_relu, matmul_dtype=matmul_dtype)

    x_isz = jnp.dtype(x2.dtype).itemsize
    w_isz = jnp.dtype(w.dtype).itemsize
    o_isz = jnp.dtype(out_dtype).itemsize
    # double-buffered row tiles + resident weights/vectors, plus headroom;
    # capped at 32 MiB (safe on v7x's 64 MiB physical VMEM).
    vmem_bytes = (2 * (tm * Cin * x_isz + tm * Cout * o_isz)
                  + 2 * (Cin * Cout * w_isz + 3 * Cout * 4))
    vmem_limit = int(min(max(4 * vmem_bytes, 8 * 2**20), 32 * 2**20))

    cost = pl.CostEstimate(
        flops=2 * M * Cin * Cout,
        transcendentals=0,
        bytes_accessed=(M * Cin * x_isz + Cin * Cout * w_isz
                        + 3 * Cout * 4 + M * Cout * o_isz))

    out = pl.pallas_call(
        kernel,
        out_shape=jax.ShapeDtypeStruct((M, Cout), out_dtype),
        grid=(n_tiles,),
        in_specs=[
            pl.BlockSpec((tm, Cin), lambda i: (i, 0)),
            # Constant block indices -> Pallas keeps these resident across the
            # row grid (no per-step re-DMA of weight/bias/gamma/beta).
            pl.BlockSpec((Cin, Cout), lambda i: (0, 0)),
            pl.BlockSpec((1, Cout), lambda i: (0, 0)),
            pl.BlockSpec((1, Cout), lambda i: (0, 0)),
            pl.BlockSpec((1, Cout), lambda i: (0, 0)),
        ],
        out_specs=pl.BlockSpec((tm, Cout), lambda i: (i, 0)),
        compiler_params=pltpu.CompilerParams(
            dimension_semantics=("parallel",),
            vmem_limit_bytes=vmem_limit),
        cost_estimate=cost,
    )(x2, w, b2, g2, bt2)

    out = out.reshape(*lead, Cout)

    if is_drop:
        # TODO(synk): training-mode nn.Dropout2d not implemented; eval-mode
        # dropout is an identity, which is what we return here.
        pass
    return out


# ----------------------------------------------------------------------------
# Plain-JAX reference for numerical checks
# ----------------------------------------------------------------------------
def _reference(x, params, *, is_norm=True, is_relu=False, eps=1e-5):
    y = jnp.matmul(x, params["w"], precision=jax.lax.Precision.HIGHEST) + params["b"]
    if is_norm:
        mu = jnp.mean(y, axis=-1, keepdims=True)
        var = jnp.mean((y - mu) ** 2, axis=-1, keepdims=True)
        y = (y - mu) / jnp.sqrt(var + eps) * params["gamma"] + params["beta"]
    if is_relu:
        y = jnp.maximum(y, 0.0)
    return y


# ----------------------------------------------------------------------------
if __name__ == "__main__":
    B, S = 2, 250          # 500 rows -> exercises the ragged-tail (OOB-masked) path
    Cin, Cout = 32, 128    # Cout multiple of 128 -> lane-dense output stores

    key = jax.random.PRNGKey(0)
    kx, kw, kb, kg, kbt = jax.random.split(key, 5)
    x = jax.random.normal(kx, (B, S, Cin), jnp.float32)
    params = {
        "w": 0.1 * jax.random.normal(kw, (Cin, Cout), jnp.float32),
        "b": 0.05 * jax.random.normal(kb, (Cout,), jnp.float32),
        "gamma": 1.0 + 0.1 * jax.random.normal(kg, (Cout,), jnp.float32),
        "beta": 0.1 * jax.random.normal(kbt, (Cout,), jnp.float32),
    }

    # f32 path: Linear + LayerNorm + ReLU
    fwd = jax.jit(functools.partial(layer_base_forward,
                                    is_norm=True, is_relu=True))
    out = jax.block_until_ready(fwd(x, params))
    ref = _reference(x, params, is_norm=True, is_relu=True)
    assert out.shape == (B, S, Cout)
    assert jnp.allclose(out, ref, atol=1e-3, rtol=1e-3), \
        float(jnp.max(jnp.abs(out - ref)))

    # Module-default config (isNorm=True, isRelu=False)
    fwd_norelu = jax.jit(functools.partial(layer_base_forward,
                                           is_norm=True, is_relu=False))
    out2 = jax.block_until_ready(fwd_norelu(x, params))
    ref2 = _reference(x, params, is_norm=True, is_relu=False)
    assert jnp.allclose(out2, ref2, atol=1e-3, rtol=1e-3)

    # bf16 fast path: bf16 MXU operands (w cast in wrapper, x cast in-kernel)
    # + bf16 output (halves dominant output HBM traffic). Epilogue stays f32.
    fwd_bf16 = jax.jit(functools.partial(layer_base_forward,
                                         is_norm=True, is_relu=True,
                                         matmul_dtype=jnp.bfloat16,
                                         out_dtype=jnp.bfloat16))
    out_bf16 = jax.block_until_ready(fwd_bf16(x, params))
    assert out_bf16.dtype == jnp.bfloat16
    assert jnp.allclose(out_bf16.astype(jnp.float32), ref, atol=7e-2, rtol=7e-2)

    print("KERNEL_OK")
</pallas_src>

<mosaic_0001>
module attributes {stable_mosaic.version = 11 : i64} {
  func.func @_layer_base_kernel(%arg0: i32, %arg1: memref<64x32xf32, #tpu.memory_space<vmem>>, %arg2: memref<32x128xf32, #tpu.memory_space<vmem>>, %arg3: memref<1x128xf32, #tpu.memory_space<vmem>>, %arg4: memref<1x128xf32, #tpu.memory_space<vmem>>, %arg5: memref<1x128xf32, #tpu.memory_space<vmem>>, %arg6: memref<64x128xf32, #tpu.memory_space<vmem>>) attributes {dimension_semantics = [#tpu.dimension_semantics<parallel>], iteration_bounds = array<i64: 8>, scalar_prefetch = 0 : i64, scratch_operands = 0 : i64, tpu.core_type = #tpu.core_type<tc>, window_params = [{transform_indices = @transform_0, window_bounds = array<i64: 64, 32>}, {pipeline_mode = #tpu.pipeline_mode<synchronous>, transform_indices = @transform_1, window_bounds = array<i64: 32, 128>}, {pipeline_mode = #tpu.pipeline_mode<synchronous>, transform_indices = @transform_2, window_bounds = array<i64: 1, 128>}, {pipeline_mode = #tpu.pipeline_mode<synchronous>, transform_indices = @transform_3, window_bounds = array<i64: 1, 128>}, {pipeline_mode = #tpu.pipeline_mode<synchronous>, transform_indices = @transform_4, window_bounds = array<i64: 1, 128>}, {transform_indices = @transform_5, window_bounds = array<i64: 64, 128>}]} {
    %c0 = arith.constant 0 : index
    %c0_0 = arith.constant 0 : index
    %0 = vector.load %arg1[%c0, %c0_0] : memref<64x32xf32, #tpu.memory_space<vmem>>, vector<64x32xf32>
    %c0_1 = arith.constant 0 : index
    %c0_2 = arith.constant 0 : index
    %1 = vector.load %arg2[%c0_1, %c0_2] : memref<32x128xf32, #tpu.memory_space<vmem>>, vector<32x128xf32>
    %cst = arith.constant dense<0.000000e+00> : vector<64x128xf32>
    %2 = tpu.matmul %0, %1, %cst {dimension_numbers = #tpu.dot_dimension_numbers<[1], [0], [0], [1], [0, 0, 1, 1], [], []>} : vector<64x32xf32>, vector<32x128xf32>, vector<64x128xf32> -> vector<64x128xf32>
    %c0_3 = arith.constant 0 : index
    %c0_4 = arith.constant 0 : index
    %3 = vector.load %arg3[%c0_3, %c0_4] : memref<1x128xf32, #tpu.memory_space<vmem>>, vector<1x128xf32>
    %4 = vector.broadcast %3 : vector<1x128xf32> to vector<64x128xf32>
    %5 = arith.addf %2, %4 : vector<64x128xf32>
    %cst_5 = arith.constant dense<0.000000e+00> : vector<64xf32>
    %6 = vector.multi_reduction <add>, %5, %cst_5 [1] : vector<64x128xf32> to vector<64xf32>
    %7 = vector.shape_cast %6 : vector<64xf32> to vector<64x1xf32>
    %cst_6 = arith.constant 1.280000e+02 : f32
    %8 = vector.broadcast %cst_6 : f32 to vector<64x1xf32>
    %9 = arith.divf %7, %8 : vector<64x1xf32>
    %10 = arith.mulf %5, %5 : vector<64x128xf32>
    %cst_7 = arith.constant dense<0.000000e+00> : vector<64xf32>
    %11 = vector.multi_reduction <add>, %10, %cst_7 [1] : vector<64x128xf32> to vector<64xf32>
    %12 = vector.shape_cast %11 : vector<64xf32> to vector<64x1xf32>
    %cst_8 = arith.constant 1.280000e+02 : f32
    %13 = vector.broadcast %cst_8 : f32 to vector<64x1xf32>
    %14 = arith.divf %12, %13 : vector<64x1xf32>
    %15 = arith.mulf %9, %9 : vector<64x1xf32>
    %16 = arith.subf %14, %15 : vector<64x1xf32>
    %cst_9 = arith.constant 0.000000e+00 : f32
    %17 = vector.broadcast %cst_9 : f32 to vector<64x1xf32>
    %18 = arith.maximumf %16, %17 : vector<64x1xf32>
    %cst_10 = arith.constant 9.99999974E-6 : f32
    %19 = vector.broadcast %cst_10 : f32 to vector<64x1xf32>
    %20 = arith.addf %18, %19 : vector<64x1xf32>
    %21 = math.rsqrt %20 : vector<64x1xf32>
    %22 = vector.broadcast %9 : vector<64x1xf32> to vector<64x128xf32>
    %23 = arith.subf %5, %22 : vector<64x128xf32>
    %24 = vector.broadcast %21 : vector<64x1xf32> to vector<64x128xf32>
    %25 = arith.mulf %23, %24 : vector<64x128xf32>
    %c0_11 = arith.constant 0 : index
    %c0_12 = arith.constant 0 : index
    %26 = vector.load %arg4[%c0_11, %c0_12] : memref<1x128xf32, #tpu.memory_space<vmem>>, vector<1x128xf32>
    %27 = vector.broadcast %26 : vector<1x128xf32> to vector<64x128xf32>
    %28 = arith.mulf %25, %27 : vector<64x128xf32>
    %c0_13 = arith.constant 0 : index
    %c0_14 = arith.constant 0 : index
    %29 = vector.load %arg5[%c0_13, %c0_14] : memref<1x128xf32, #tpu.memory_space<vmem>>, vector<1x128xf32>
    %30 = vector.broadcast %29 : vector<1x128xf32> to vector<64x128xf32>
    %31 = arith.addf %28, %30 : vector<64x128xf32>
    %cst_15 = arith.constant 0.000000e+00 : f32
    %32 = vector.broadcast %cst_15 : f32 to vector<64x128xf32>
    %33 = arith.maximumf %31, %32 : vector<64x128xf32>
    %c0_16 = arith.constant 0 : index
    %c0_17 = arith.constant 0 : index
    %34 = vector.load %arg6[%c0_16, %c0_17] : memref<64x128xf32, #tpu.memory_space<vmem>>, vector<64x128xf32>
    tpu.vector_store %arg6[%c0_16, %c0_17], %33 {strides = array<i32>} : memref<64x128xf32, #tpu.memory_space<vmem>>, vector<64x128xf32>,
    return
  }
  func.func @transform_0(%arg0: i32) -> (i32, i32) {
    %c0_i32 = arith.constant 0 : i32
    %c0_i32_0 = arith.constant 0 : i32
    return %arg0, %c0_i32 : i32, i32
  }
  func.func @transform_1(%arg0: i32) -> (i32, i32) {
    %c0_i32 = arith.constant 0 : i32
    %c0_i32_0 = arith.constant 0 : i32
    %c0_i32_1 = arith.constant 0 : i32
    return %c0_i32, %c0_i32_0 : i32, i32
  }
  func.func @transform_2(%arg0: i32) -> (i32, i32) {
    %c0_i32 = arith.constant 0 : i32
    %c0_i32_0 = arith.constant 0 : i32
    %c0_i32_1 = arith.constant 0 : i32
    return %c0_i32, %c0_i32_0 : i32, i32
  }
  func.func @transform_3(%arg0: i32) -> (i32, i32) {
    %c0_i32 = arith.constant 0 : i32
    %c0_i32_0 = arith.constant 0 : i32
    %c0_i32_1 = arith.constant 0 : i32
    return %c0_i32, %c0_i32_0 : i32, i32
  }
  func.func @transform_4(%arg0: i32) -> (i32, i32) {
    %c0_i32 = arith.constant 0 : i32
    %c0_i32_0 = arith.constant 0 : i32
    %c0_i32_1 = arith.constant 0 : i32
    return %c0_i32, %c0_i32_0 : i32, i32
  }
  func.func @transform_5(%arg0: i32) -> (i32, i32) {
    %c0_i32 = arith.constant 0 : i32
    %c0_i32_0 = arith.constant 0 : i32
    return %arg0, %c0_i32 : i32, i32
  }
}

</mosaic_0001>

<llo_original>
// kernel: layer_base_forward.1
$region0: #{layer_base_forward.1}
  #allocation0 [shape = 'u32[]', space=smem, size = 0x4, offset = 0x4, fixed_abs, tag = 'smem constant byte address 0x4 - core index']
  #allocation1 [shape = 'u32[144,128]{1,0:T(1,128)}', space=vmem, size = 0x12000, scoped, tag = 'internal scratch']
  %s0 = inlined_call_operand.vmem [shape: f32[500,32], index: 0, kind: input, shape index: {}]
  %s1 = inlined_call_operand.vmem [shape: f32[32,128], index: 1, kind: input, shape index: {}]
  %s2 = inlined_call_operand.vmem [shape: f32[1,128], index: 2, kind: input, shape index: {}]
  %s3 = inlined_call_operand.vmem [shape: f32[1,128], index: 3, kind: input, shape index: {}]
  %s4 = inlined_call_operand.vmem [shape: f32[1,128], index: 4, kind: input, shape index: {}]
  %s5 = inlined_call_operand.vmem [shape: f32[500,128], index: 5, kind: output, shape index: {}]
  %s6 = sld [smem:[#allocation0]]
  $region101: #{layer_base_forward.1} parent=0
    _
  %s8 = ssub.s32 1, %s6
  %s9 = scalar_select 0, %s8, %s6
  $region1: #{layer_base_forward.1} parent=0
    #allocation2 [shape = 'u8[65536]{0}', space=vmem, size = 0x10000, scoped, tag = 'output window, operand 0']
    loop: start=0, step=1, limit=10
    $region2: #{layer_base_forward.1} parent=1 // loop_pre_header
      _
    $region3: #{layer_base_forward.1} parent=1 // loop_header
      %s11 = sphi 0, %s15
      %p12 = scmp.ge.s32.totalorder %s11, 10
      %s21 = sphi 0, %s23
      %s24 = sphi 0, %s21
      %s25 = sphi 0, %s24
      %s41 = sphi 0, %s25
      %s45 = sphi 0, %s45
      %s47 = sphi 0, %s45
      %s48 = sphi 0, %s47
      %s62 = sphi 0, %s48
      %s66 = sphi 0, %s66
      %s68 = sphi 0, %s66
      %s69 = sphi 0, %s68
      %s83 = sphi 0, %s69
      %s87 = sphi 0, %s87
      %s89 = sphi 0, %s87
      %s90 = sphi 0, %s89
      %s104 = sphi 0, %s90
      %s108 = sphi 0, %s108
      %s110 = sphi 0, %s108
      %s111 = sphi 0, %s110
      %s125 = sphi 0, %s111
      %s131 = sphi 0, %s133
      %s134 = sphi 0, %s131
      %s135 = sphi 0, %s134
      %s151 = sphi 0, %s135
    $region4: #{layer_base_forward.1} parent=1 // loop_header_branch
      %14 = sbr.rel (%p12) target = $region8
    $region5: #{layer_base_forward.1} parent=1 // loop_body
      %s16 = ssub.s32 %s11, 1
      %s17 = ssub.s32 %s11, 2
      %s18 = sadd.s32 %s11, 1
      %s19 = ssub.s32 %s11, %s18
      %p20 = scmp.eq.s32.totalorder %s19, 0
      %s22 = sadd.s32 %s21, 1
      %s23 = scalar_select %p20, %s21, %s22
      %p26 = pneg %p20
      %p27 = scmp.eq.s32.totalorder %s11, 7
      %p28 = por %p26, %p27
      %p29 = scmp.ne.s32.totalorder %s21, %s24
      %p30 = scmp.eq.s32.totalorder %s11, 0
      %p31 = por %p29, %p30
      %p32 = scmp.ne.s32.totalorder %s21, %s24
      %p33 = scmp.eq.s32.totalorder %s16, 7
      %p34 = por %p32, %p33
      %p35 = scmp.ne.s32.totalorder %s24, %s25
      %p36 = scmp.eq.s32.totalorder %s16, 0
      %p37 = por %p35, %p36
      %p38 = scmp.ne.s32.totalorder %s24, %s25
      %p39 = scmp.eq.s32.totalorder %s17, 7
      %p40 = por %p38, %p39
      %p42 = scmp.ne.s32.totalorder %s25, %s41
      %p43 = scmp.eq.s32.totalorder %s17, 0
      %p44 = por %p42, %p43
      %s46 = sadd.s32 %s45, 1
      %p49 = scmp.eq.s32.totalorder %s11, 7
      %p50 = scmp.ne.s32.totalorder %s45, %s47
      %p51 = scmp.eq.s32.totalorder %s11, 0
      %p52 = por %p50, %p51
      %p53 = scmp.ne.s32.totalorder %s45, %s47
      %p54 = scmp.eq.s32.totalorder %s16, 7
      %p55 = por %p53, %p54
      %p56 = scmp.ne.s32.totalorder %s47, %s48
      %p57 = scmp.eq.s32.totalorder %s16, 0
      %p58 = por %p56, %p57
      %p59 = scmp.ne.s32.totalorder %s47, %s48
      %p60 = scmp.eq.s32.totalorder %s17, 7
      %p61 = por %p59, %p60
      %p63 = scmp.ne.s32.totalorder %s48, %s62
      %p64 = scmp.eq.s32.totalorder %s17, 0
      %p65 = por %p63, %p64
      %s67 = sadd.s32 %s66, 1
      %p70 = scmp.eq.s32.totalorder %s11, 7
      %p71 = scmp.ne.s32.totalorder %s66, %s68
      %p72 = scmp.eq.s32.totalorder %s11, 0
      %p73 = por %p71, %p72
      %p74 = scmp.ne.s32.totalorder %s66, %s68
      %p75 = scmp.eq.s32.totalorder %s16, 7
      %p76 = por %p74, %p75
      %p77 = scmp.ne.s32.totalorder %s68, %s69
      %p78 = scmp.eq.s32.totalorder %s16, 0
      %p79 = por %p77, %p78
      %p80 = scmp.ne.s32.totalorder %s68, %s69
      %p81 = scmp.eq.s32.totalorder %s17, 7
      %p82 = por %p80, %p81
      %p84 = scmp.ne.s32.totalorder %s69, %s83
      %p85 = scmp.eq.s32.totalorder %s17, 0
      %p86 = por %p84, %p85
      %s88 = sadd.s32 %s87, 1
      %p91 = scmp.eq.s32.totalorder %s11, 7
      %p92 = scmp.ne.s32.totalorder %s87, %s89
      %p93 = scmp.eq.s32.totalorder %s11, 0
      %p94 = por %p92, %p93
      %p95 = scmp.ne.s32.totalorder %s87, %s89
      %p96 = scmp.eq.s32.totalorder %s16, 7
      %p97 = por %p95, %p96
      %p98 = scmp.ne.s32.totalorder %s89, %s90
      %p99 = scmp.eq.s32.totalorder %s16, 0
      %p100 = por %p98, %p99
      %p101 = scmp.ne.s32.totalorder %s89, %s90
      %p102 = scmp.eq.s32.totalorder %s17, 7
      %p103 = por %p101, %p102
      %p105 = scmp.ne.s32.totalorder %s90, %s104
      %p106 = scmp.eq.s32.totalorder %s17, 0
      %p107 = por %p105, %p106
      %s109 = sadd.s32 %s108, 1
      %p112 = scmp.eq.s32.totalorder %s11, 7
      %p113 = scmp.ne.s32.totalorder %s108, %s110
      %p114 = scmp.eq.s32.totalorder %s11, 0
      %p115 = por %p113, %p114
      %p116 = scmp.ne.s32.totalorder %s108, %s110
      %p117 = scmp.eq.s32.totalorder %s16, 7
      %p118 = por %p116, %p117
      %p119 = scmp.ne.s32.totalorder %s110, %s111
      %p120 = scmp.eq.s32.totalorder %s16, 0
      %p121 = por %p119, %p120
      %p122 = scmp.ne.s32.totalorder %s110, %s111
      %p123 = scmp.eq.s32.totalorder %s17, 7
      %p124 = por %p122, %p123
      %p126 = scmp.ne.s32.totalorder %s111, %s125
      %p127 = scmp.eq.s32.totalorder %s17, 0
      %p128 = por %p126, %p127
      %s129 = ssub.s32 %s11, %s18
      %p130 = scmp.eq.s32.totalorder %s129, 0
      %s132 = sadd.s32 %s131, 1
      %s133 = scalar_select %p130, %s131, %s132
      %p136 = pneg %p130
      %p137 = scmp.eq.s32.totalorder %s11, 7
      %p138 = por %p136, %p137
      %p139 = scmp.ne.s32.totalorder %s131, %s134
      %p140 = scmp.eq.s32.totalorder %s11, 0
      %p141 = por %p139, %p140
      %p142 = scmp.ne.s32.totalorder %s131, %s134
      %p143 = scmp.eq.s32.totalorder %s16, 7
      %p144 = por %p142, %p143
      %p145 = scmp.ne.s32.totalorder %s134, %s135
      %p146 = scmp.eq.s32.totalorder %s16, 0
      %p147 = por %p145, %p146
      %p148 = scmp.ne.s32.totalorder %s134, %s135
      %p149 = scmp.eq.s32.totalorder %s17, 7
      %p150 = por %p148, %p149
      %p152 = scmp.ne.s32.totalorder %s135, %s151
      %p153 = scmp.eq.s32.totalorder %s17, 0
      %p154 = por %p152, %p153
      %p155 = scmp.le.s32.totalorder 1, %s11
      %p156 = scmp.lt.s32.totalorder %s11, 9
      %p157 = pnand %p155, %p156
      %p158 = pneg %p157
      // Predicated region
      $region9: #{layer_base_forward.1} parent=5 // pred_check
        _
      $region10: #{layer_base_forward.1} parent=5 // pred_check_branch
        %160 = sbr.rel (%p157) target = $region12
      $region11: #{layer_base_forward.1} parent=5 // pred_region
        %s161 = ssub.s32 %s11, 1
        // Predicated region
        $region13: #{layer_base_forward.1} parent=11 // pred_check
          %p162 = pneg %p58
        $region14: #{layer_base_forward.1} parent=11 // pred_check_branch
          %164 = sbr.rel (%p162) target = $region16
        $region15: #{layer_base_forward.1} parent=11 // pred_region
          _
        $region16: #{layer_base_forward.1} parent=11 // pred_fallthru
          _
        // Predicated region
        $region17: #{layer_base_forward.1} parent=11 // pred_check
          %p165 = pneg %p79
        $region18: #{layer_base_forward.1} parent=11 // pred_check_branch
          %167 = sbr.rel (%p165) target = $region20
        $region19: #{layer_base_forward.1} parent=11 // pred_region
          _
        $region20: #{layer_base_forward.1} parent=11 // pred_fallthru
          _
        // Predicated region
        $region21: #{layer_base_forward.1} parent=11 // pred_check
          %p168 = pneg %p100
        $region22: #{layer_base_forward.1} parent=11 // pred_check_branch
          %170 = sbr.rel (%p168) target = $region24
        $region23: #{layer_base_forward.1} parent=11 // pred_region
          _
        $region24: #{layer_base_forward.1} parent=11 // pred_fallthru
          _
        // Predicated region
        $region25: #{layer_base_forward.1} parent=11 // pred_check
          %p171 = pneg %p121
        $region26: #{layer_base_forward.1} parent=11 // pred_check_branch
          %173 = sbr.rel (%p171) target = $region28
        $region27: #{layer_base_forward.1} parent=11 // pred_region
          _
        $region28: #{layer_base_forward.1} parent=11 // pred_fallthru
          _
      $region12: #{layer_base_forward.1} parent=5 // pred_fallthru
        _
      %p174 = scmp.lt.s32.totalorder %s11, 8
      // Predicated region
      $region29: #{layer_base_forward.1} parent=5 // pred_check
        %p175 = pneg %p174
      $region30: #{layer_base_forward.1} parent=5 // pred_check_branch
        %177 = sbr.rel (%p175) target = $region32
      $region31: #{layer_base_forward.1} parent=5 // pred_region
        // Predicated region
        $region33: #{layer_base_forward.1} parent=31 // pred_check
          %p178 = pneg %p31
        $region34: #{layer_base_forward.1} parent=31 // pred_check_branch
          %180 = sbr.rel (%p178) target = $region36
        $region35: #{layer_base_forward.1} parent=31 // pred_region
          %s181 = smul.u32 8, %s11
          %s182 = ssub.s32 63, %s181
          %p183 = scmp.lt.s32.totalorder %s182, 8
          %s184 = scalar_select %p183, %s182, 8
          %s185 = smul.u32 128, %s184
          %p186 = scmp.lt.s32.totalorder %s181, 62
          %s187 = scalar_select %p186, %s181, 62
          %s188 = smul.addr %s187, 8
          %s189 = scalar_lea.vmem %s0, %s188
          %s190 = smul.u32 8, %s11
          %s191 = ssub.s32 63, %s190
          %p192 = scmp.lt.s32.totalorder %s191, 8
          %s193 = scalar_select %p192, %s191, 8
          %s194 = smul.u32 128, %s193
        $region36: #{layer_base_forward.1} parent=31 // pred_fallthru
          _
      $region32: #{layer_base_forward.1} parent=5 // pred_fallthru
        _
      %p195 = scmp.le.s32.totalorder 1, %s11
      %p196 = scmp.lt.s32.totalorder %s11, 9
      %p197 = pnand %p195, %p196
      %p198 = pneg %p197
      // Predicated region
      $region37: #{layer_base_forward.1} parent=5 // pred_check
        _
      $region38: #{layer_base_forward.1} parent=5 // pred_check_branch
        %200 = sbr.rel (%p197) target = $region40
      $region39: #{layer_base_forward.1} parent=5 // pred_region
        %s201 = ssub.s32 %s11, 1
        %s202 = smul.u32 8, %s16
        %s203 = ssub.s32 63, %s202
        %p204 = scmp.lt.s32.totalorder %s203, 8
        %s205 = scalar_select %p204, %s203, 8
        %s206 = smul.u32 128, %s205
        %p207 = scmp.lt.s32.totalorder %s202, 62
        %s208 = scalar_select %p207, %s202, 62
        %s209 = smul.addr %s208, 8
        %s210 = scalar_lea.vmem %s0, %s209
        %p211 = pneg %p37
        %p212 = pneg %p34
        %p213 = pneg %p58
        %p214 = pneg %p55
        %p215 = pneg %p79
        %p216 = pneg %p76
        %p217 = pneg %p100
        %p218 = pneg %p97
        %p219 = pneg %p121
        %p220 = pneg %p118
        %p221 = pneg %p147
        %p222 = pneg %p144
        %s223 = sand.u32 %s134, 1
        %s224 = sand.u32 %s134, 1
        %s225 = smul.addr %s224, 64
        %s226 = scalar_lea.vmem [#allocation2], %s225
        %s227 = smul.u32 8, %s16
        %s228 = ssub.s32 63, %s227
        %p229 = scmp.lt.s32.totalorder %s228, 8
        %s230 = scalar_select %p229, %s228, 8
        %s231 = smul.u32 128, %s230
        %p232 = scmp.lt.s32.totalorder %s227, 62
        %s233 = scalar_select %p232, %s227, 62
        %s234 = smul.addr %s233, 8
        %s235 = scalar_lea.vmem %s0, %s234
        %s236 = smul.u32 8, %s16
        %s237 = ssub.s32 63, %s236
        %p238 = scmp.lt.s32.totalorder %s237, 8
        %s239 = scalar_select %p238, %s237, 8
        %s240 = smul.u32 128, %s239
        %s241 = smul.u32 8, %s16
        %s242 = ssub.s32 63, %s241
        %p243 = scmp.lt.s32.totalorder %s242, 8
        %s244 = scalar_select %p243, %s242, 8
        %s245 = smul.u32 128, %s244
        %v246 = vld [vmem:[%s235] sm:$0xff]
        %v247 = vld [vmem:[%s235 + $0x8] sm:$0xff]
        %v248 = vld [vmem:[%s235 + $0x10] sm:$0xff]
        %v249 = vld [vmem:[%s235 + $0x18] sm:$0xff]
        %v250 = vld [vmem:[%s235 + $0x20] sm:$0xff]
        %v251 = vld [vmem:[%s235 + $0x28] sm:$0xff]
        %v252 = vld [vmem:[%s235 + $0x30] sm:$0xff]
        %v253 = vld [vmem:[%s235 + $0x38] sm:$0xff]
        %v254 = vld [vmem:[%s1] sm:$0xff]
        %v255 = vld [vmem:[%s1 + $0x8] sm:$0xff]
        %v256 = vld [vmem:[%s1 + $0x10] sm:$0xff]
        %v257 = vld [vmem:[%s1 + $0x18] sm:$0xff]
        %v258 = vld [vmem:[%s2] sm:$0x1]
        %v260 = vlaneseq
        %v261 = vshrl.u32 %v260, 7
        %v262 = vsub.s32 0, %v261
        %v263 = vrot.slane %v258, %v262
        %vm265 = vcmask 261120
        %v267 = vsel %vm265, %v246, 0
        %v270 = vsel %vm265, %v247, 0
        %v273 = vsel %vm265, %v248, 0
        %v276 = vsel %vm265, %v249, 0
        %v279 = vsel %vm265, %v250, 0
        %v282 = vsel %vm265, %v251, 0
        %v285 = vsel %vm265, %v252, 0
        %v288 = vsel %vm265, %v253, 0
        %290 = vmatprep.subr.mxu0 0.0
        %291 = vmatpush1.msra.mxu0 %v254
        %292 = vmatprep.subr.mxu0 0.0
        %293 = vmatpush1.msra.mxu0 %v255
        %294 = vmatprep.subr.mxu0 0.0
        %295 = vmatpush1.msra.mxu0 %v256
        %296 = vmatprep.subr.mxu0 0.0
        %297 = vmatpush1.msra.mxu0 %v257
        %298 = vmatprep.subr.mxu0 0.0
        %299 = vmatpush1.msra.mxu0 0.0
        %300 = vmatprep.subr.mxu0 0.0
        %301 = vmatpush1.msra.mxu0 0.0
        %302 = vmatprep.subr.mxu0 0.0
        %303 = vmatpush1.msra.mxu0 0.0
        %304 = vmatprep.subr.mxu0 0.0
        %305 = vmatpush1.msra.mxu0 0.0
        %306 = vmatprep.subr.mxu0 0.0
        %307 = vmatpush1.msra.mxu0 0.0
        %308 = vmatprep.subr.mxu0 0.0
        %309 = vmatpush1.msra.mxu0 0.0
        %310 = vmatprep.subr.mxu0 0.0
        %311 = vmatpush1.msra.mxu0 0.0
        %312 = vmatprep.subr.mxu0 0.0
        %313 = vmatpush1.msra.mxu0 0.0
        %314 = vmatprep.subr.mxu0 0.0
        %315 = vmatpush1.msra.mxu0 0.0
        %316 = vmatprep.subr.mxu0 0.0
        %317 = vmatpush1.msra.mxu0 0.0
        %318 = vmatprep.subr.mxu0 0.0
        %319 = vmatpush1.msra.mxu0 0.0
        %320 = vmatprep.subr.mxu0 0.0
        %321 = vmatpush1.msra.mxu0 0.0
        %322 = vmatprep.subr.mxu0 0.0
        %323 = vmatpush1.msra.mxu0 0.0
        %324 = vmatprep.subr.mxu0 0.0
        %325 = vmatpush1.msra.mxu0 0.0
        %326 = vmatprep.subr.mxu0 0.0
        %327 = vmatpush1.msra.mxu0 0.0
        %328 = vmatprep.subr.mxu0 0.0
        %329 = vmatpush1.msra.mxu0 0.0
        %330 = vmatprep.subr.mxu0 0.0
        %331 = vmatpush1.msra.mxu0 0.0
        %332 = vmatprep.subr.mxu0 0.0
        %333 = vmatpush1.msra.mxu0 0.0
        %334 = vmatprep.subr.mxu0 0.0
        %335 = vmatpush1.msra.mxu0 0.0
        %336 = vmatprep.subr.mxu0 0.0
        %337 = vmatpush1.msra.mxu0 0.0
        %338 = vmatprep.subr.mxu0 0.0
        %339 = vmatpush1.msra.mxu0 0.0
        %340 = vmatprep.subr.mxu0 0.0
        %341 = vmatpush1.msra.mxu0 0.0
        %342 = vmatprep.subr.mxu0 0.0
        %343 = vmatpush1.msra.mxu0 0.0
        %344 = vmatprep.subr.mxu0 0.0
        %345 = vmatpush1.msra.mxu0 0.0
        %346 = vmatprep.subr.mxu0 0.0
        %347 = vmatpush1.msra.mxu0 0.0
        %348 = vmatprep.subr.mxu0 0.0
        %349 = vmatpush1.msra.mxu0 0.0
        %350 = vmatprep.subr.mxu0 0.0
        %351 = vmatpush1.msra.mxu0 0.0
        %352 = vmatprep.subr.mxu0 0.0
        %353 = vmatpush1.msra.mxu0 0.0
        %354 = vmatprep.mubr.f32.mxu0 0.0
        %355 = vmatmul.mubr.f32.gmra.mrb[0].mxu0 %v267
        %v356 = vpop.f32.mrb[0].mxu0
        %v357 = vadd.f32 %v263, %v356
        %v358 = vpop.f32.mrb[0].mxu0
        %359 = vmatprep.mubr.f32.mxu0 0.0
        %360 = vmatmul.mubr.f32.gmra.mrb[0].mxu0 %v270
        %v361 = vpop.f32.mrb[0].mxu0
        %v362 = vadd.f32 %v263, %v361
        %v363 = vpop.f32.mrb[0].mxu0
        %364 = vmatprep.mubr.f32.mxu0 0.0
        %365 = vmatmul.mubr.f32.gmra.mrb[0].mxu0 %v273
        %v366 = vpop.f32.mrb[0].mxu0
        %v367 = vadd.f32 %v263, %v366
        %v368 = vpop.f32.mrb[0].mxu0
        %369 = vmatprep.mubr.f32.mxu0 0.0
        %370 = vmatmul.mubr.f32.gmra.mrb[0].mxu0 %v276
        %v371 = vpop.f32.mrb[0].mxu0
        %v372 = vadd.f32 %v263, %v371
        %v373 = vpop.f32.mrb[0].mxu0
        %374 = vmatprep.mubr.f32.mxu0 0.0
        %375 = vmatmul.mubr.f32.gmra.mrb[0].mxu0 %v279
        %v376 = vpop.f32.mrb[0].mxu0
        %v377 = vadd.f32 %v263, %v376
        %v378 = vpop.f32.mrb[0].mxu0
        %379 = vmatprep.mubr.f32.mxu0 0.0
        %380 = vmatmul.mubr.f32.gmra.mrb[0].mxu0 %v282
        %v381 = vpop.f32.mrb[0].mxu0
        %v382 = vadd.f32 %v263, %v381
        %v383 = vpop.f32.mrb[0].mxu0
        %384 = vmatprep.mubr.f32.mxu0 0.0
        %385 = vmatmul.mubr.f32.gmra.mrb[0].mxu0 %v285
        %v386 = vpop.f32.mrb[0].mxu0
        %v387 = vadd.f32 %v263, %v386
        %v388 = vpop.f32.mrb[0].mxu0
        %389 = vmatprep.mubr.f32.mxu0 0.0
        %390 = vmatmul.mubr.f32.gmra.mrb[0].mxu0 %v288
        %v391 = vpop.f32.mrb[0].mxu0
        %v392 = vadd.f32 %v263, %v391
        %v393 = vpop.f32.mrb[0].mxu0
        %394 = vdwg.mxu0
        %395 = vadd.xlane.f32.xlu0 %v357
        %v396 = vpop.xlane.xlu0 %395
        %397 = vadd.xlane.f32.xlu0 %v362
        %v398 = vpop.xlane.xlu0 %397
        %399 = vadd.xlane.f32.xlu0 %v367
        %v400 = vpop.xlane.xlu0 %399
        %401 = vadd.xlane.f32.xlu0 %v372
        %v402 = vpop.xlane.xlu0 %401
        %403 = vadd.xlane.f32.xlu0 %v377
        %v404 = vpop.xlane.xlu0 %403
        %405 = vadd.xlane.f32.xlu0 %v382
        %v406 = vpop.xlane.xlu0 %405
        %407 = vadd.xlane.f32.xlu0 %v387
        %v408 = vpop.xlane.xlu0 %407
        %409 = vadd.xlane.f32.xlu0 %v392
        %v410 = vpop.xlane.xlu0 %409
        %v411 = vrcp.pop 128.0
        %v412 = vmul.f32 %v396, %v411
        %v413 = vmul.f32 %v398, %v411
        %v414 = vmul.f32 %v400, %v411
        %v415 = vmul.f32 %v402, %v411
        %v416 = vmul.f32 %v404, %v411
        %v417 = vmul.f32 %v406, %v411
        %v418 = vmul.f32 %v408, %v411
        %v419 = vmul.f32 %v410, %v411
        %v420 = vmul.f32 %v357, %v357
        %v421 = vmul.f32 %v362, %v362
        %v422 = vmul.f32 %v367, %v367
        %v423 = vmul.f32 %v372, %v372
        %v424 = vmul.f32 %v377, %v377
        %v425 = vmul.f32 %v382, %v382
        %v426 = vmul.f32 %v387, %v387
        %v427 = vmul.f32 %v392, %v392
        %428 = vadd.xlane.f32.xlu0 %v420
        %v429 = vpop.xlane.xlu0 %428
        %430 = vadd.xlane.f32.xlu0 %v421
        %v431 = vpop.xlane.xlu0 %430
        %432 = vadd.xlane.f32.xlu0 %v422
        %v433 = vpop.xlane.xlu0 %432
        %434 = vadd.xlane.f32.xlu0 %v423
        %v435 = vpop.xlane.xlu0 %434
        %436 = vadd.xlane.f32.xlu0 %v424
        %v437 = vpop.xlane.xlu0 %436
        %438 = vadd.xlane.f32.xlu0 %v425
        %v439 = vpop.xlane.xlu0 %438
        %440 = vadd.xlane.f32.xlu0 %v426
        %v441 = vpop.xlane.xlu0 %440
        %442 = vadd.xlane.f32.xlu0 %v427
        %v443 = vpop.xlane.xlu0 %442
        %v444 = vmul.f32 %v429, %v411
        %v445 = vmul.f32 %v431, %v411
        %v446 = vmul.f32 %v433, %v411
        %v447 = vmul.f32 %v435, %v411
        %v448 = vmul.f32 %v437, %v411
        %v449 = vmul.f32 %v439, %v411
        %v450 = vmul.f32 %v441, %v411
        %v451 = vmul.f32 %v443, %v411
        %v452 = vmul.f32 %v412, %v412
        %v453 = vmul.f32 %v413, %v413
        %v454 = vmul.f32 %v414, %v414
        %v455 = vmul.f32 %v415, %v415
        %v456 = vmul.f32 %v416, %v416
        %v457 = vmul.f32 %v417, %v417
        %v458 = vmul.f32 %v418, %v418
        %v459 = vmul.f32 %v419, %v419
        %v460 = vsub.f32 %v444, %v452
        %v461 = vsub.f32 %v445, %v453
        %v462 = vsub.f32 %v446, %v454
        %v463 = vsub.f32 %v447, %v455
        %v464 = vsub.f32 %v448, %v456
        %v465 = vsub.f32 %v449, %v457
        %v466 = vsub.f32 %v450, %v458
        %v467 = vsub.f32 %v451, %v459
        %v468 = vmax.f32 %v460, 0.0
        %v469 = vmax.f32 %v461, 0.0
        %v470 = vmax.f32 %v462, 0.0
        %v471 = vmax.f32 %v463, 0.0
        %v472 = vmax.f32 %v464, 0.0
        %v473 = vmax.f32 %v465, 0.0
        %v474 = vmax.f32 %v466, 0.0
        %v475 = vmax.f32 %v467, 0.0
        %v476 = vadd.f32 %v468, 1e-05
        %v477 = vadd.f32 %v469, 1e-05
        %v478 = vadd.f32 %v470, 1e-05
        %v479 = vadd.f32 %v471, 1e-05
        %v480 = vadd.f32 %v472, 1e-05
        %v481 = vadd.f32 %v473, 1e-05
        %v482 = vadd.f32 %v474, 1e-05
        %v483 = vadd.f32 %v475, 1e-05
        %v484 = vrsqrt.pop %v476
        %v485 = vrsqrt.pop %v477
        %v486 = vrsqrt.pop %v478
        %v487 = vrsqrt.pop %v479
        %v488 = vrsqrt.pop %v480
        %v489 = vrsqrt.pop %v481
        %v490 = vrsqrt.pop %v482
        %v491 = vrsqrt.pop %v483
        %v492 = vsub.f32 %v357, %v412
        %v493 = vsub.f32 %v362, %v413
        %v494 = vsub.f32 %v367, %v414
        %v495 = vsub.f32 %v372, %v415
        %v496 = vsub.f32 %v377, %v416
        %v497 = vsub.f32 %v382, %v417
        %v498 = vsub.f32 %v387, %v418
        %v499 = vsub.f32 %v392, %v419
        %v500 = vmul.f32 %v492, %v484
        %v501 = vmul.f32 %v493, %v485
        %v502 = vmul.f32 %v494, %v486
        %v503 = vmul.f32 %v495, %v487
        %v504 = vmul.f32 %v496, %v488
        %v505 = vmul.f32 %v497, %v489
        %v506 = vmul.f32 %v498, %v490
        %v507 = vmul.f32 %v499, %v491
        %v508 = vld [vmem:[%s3] sm:$0x1]
        %v510 = vlaneseq
        %v511 = vshrl.u32 %v510, 7
        %v512 = vsub.s32 0, %v511
        %v513 = vrot.slane %v508, %v512
        %v515 = vmul.f32 %v500, %v513
        %v516 = vmul.f32 %v501, %v513
        %v517 = vmul.f32 %v502, %v513
        %v518 = vmul.f32 %v503, %v513
        %v519 = vmul.f32 %v504, %v513
        %v520 = vmul.f32 %v505, %v513
        %v521 = vmul.f32 %v506, %v513
        %v522 = vmul.f32 %v507, %v513
        %v523 = vld [vmem:[%s4] sm:$0x1]
        %v525 = vlaneseq
        %v526 = vshrl.u32 %v525, 7
        %v527 = vsub.s32 0, %v526
        %v528 = vrot.slane %v523, %v527
        %v530 = vadd.f32 %v515, %v528
        %v531 = vadd.f32 %v516, %v528
        %v532 = vadd.f32 %v517, %v528
        %v533 = vadd.f32 %v518, %v528
        %v534 = vadd.f32 %v519, %v528
        %v535 = vadd.f32 %v520, %v528
        %v536 = vadd.f32 %v521, %v528
        %v537 = vadd.f32 %v522, %v528
        %v538 = vmax.f32 %v530, 0.0
        %v539 = vmax.f32 %v531, 0.0
        %v540 = vmax.f32 %v532, 0.0
        %v541 = vmax.f32 %v533, 0.0
        %v542 = vmax.f32 %v534, 0.0
        %v543 = vmax.f32 %v535, 0.0
        %v544 = vmax.f32 %v536, 0.0
        %v545 = vmax.f32 %v537, 0.0
        %546 = vst [vmem:[%s226] sm:$0xff] %v538
        %547 = vst [vmem:[%s226 + $0x8] sm:$0xff] %v539
        %548 = vst [vmem:[%s226 + $0x10] sm:$0xff] %v540
        %549 = vst [vmem:[%s226 + $0x18] sm:$0xff] %v541
        %550 = vst [vmem:[%s226 + $0x20] sm:$0xff] %v542
        %551 = vst [vmem:[%s226 + $0x28] sm:$0xff] %v543
        %552 = vst [vmem:[%s226 + $0x30] sm:$0xff] %v544
        %553 = vst [vmem:[%s226 + $0x38] sm:$0xff] %v545
        %s554 = sand.u32 %s134, 1
        %s555 = sand.u32 %s134, 1
        %s556 = smul.addr %s555, 64
        %s557 = scalar_lea.vmem [#allocation2], %s556
        // Predicated region
        $region41: #{layer_base_forward.1} parent=39 // pred_check
          %p558 = pneg %p144
        $region42: #{layer_base_forward.1} parent=39 // pred_check_branch
          %560 = sbr.rel (%p558) target = $region44
        $region43: #{layer_base_forward.1} parent=39 // pred_region
          %s561 = smul.u32 8, %s16
          %s562 = ssub.s32 63, %s561
          %p563 = scmp.lt.s32.totalorder %s562, 8
          %s564 = scalar_select %p563, %s562, 8
          %s565 = smul.u32 128, %s564
          %p566 = scmp.ne.s32.totalorder 0, %s565
          %s567 = smul.addr %s561, 8
          %s568 = scalar_lea.vmem %s5, %s567
          // Predicated region
          $region45: #{layer_base_forward.1} parent=43 // pred_check
            %p569 = pneg %p566
          $region46: #{layer_base_forward.1} parent=43 // pred_check_branch
            %571 = sbr.rel (%p569) target = $region48
          $region47: #{layer_base_forward.1} parent=43 // pred_region
            // Predicated region
            $region49: #{layer_base_forward.1} parent=47 // pred_check
              _
            $region50: #{layer_base_forward.1} parent=47 // pred_check_branch
              %573 = sbr.rel (0) target = $region52
            $region51: #{layer_base_forward.1} parent=47 // pred_region
              // Predicated region
              $region71: #{layer_base_forward.1} parent=51 // pred_check
                _
              $region72: #{layer_base_forward.1} parent=51 // pred_check_branch
                %636 = sbr.rel (0) target = $region74
              $region73: #{layer_base_forward.1} parent=51 // pred_region
                %s637 = sshrl.u32 %s564, 3
                // While loop
                $region75: #{layer_base_forward.1} parent=73 // loop_pre_header
                  _
                $region76: #{layer_base_forward.1} parent=73 // loop_header
                  %s639 = sphi 0, %s641
                  %p640 = scmp.ge.s32.totalorder %s639, %s637
                  %s644 = sphi 0, %s665
                  %s645 = sphi %s557, %s668
                  %s646 = sphi %s568, %s669
                $region77: #{layer_base_forward.1} parent=73 // loop_header_branch
                  %643 = sbr.rel (%p640) target = $region81
                $region78: #{layer_base_forward.1} parent=73 // loop_body
                  %v647 = vld [vmem:[%s645] sm:$0xff]
                  %648 = vst [vmem:[%s646] sm:$0xff] %v647
                  %v649 = vld [vmem:[%s645 + $0x8] sm:$0xff]
                  %650 = vst [vmem:[%s646 + $0x8] sm:$0xff] %v649
                  %v651 = vld [vmem:[%s645 + $0x10] sm:$0xff]
                  %652 = vst [vmem:[%s646 + $0x10] sm:$0xff] %v651
                  %v653 = vld [vmem:[%s645 + $0x18] sm:$0xff]
                  %654 = vst [vmem:[%s646 + $0x18] sm:$0xff] %v653
                  %v655 = vld [vmem:[%s645 + $0x20] sm:$0xff]
                  %656 = vst [vmem:[%s646 + $0x20] sm:$0xff] %v655
                  %v657 = vld [vmem:[%s645 + $0x28] sm:$0xff]
                  %658 = vst [vmem:[%s646 + $0x28] sm:$0xff] %v657
                  %v659 = vld [vmem:[%s645 + $0x30] sm:$0xff]
                  %660 = vst [vmem:[%s646 + $0x30] sm:$0xff] %v659
                  %v661 = vld [vmem:[%s645 + $0x38] sm:$0xff]
                  %662 = vst [vmem:[%s646 + $0x38] sm:$0xff] %v661
                  %s663 = sadd.s32 1, %s644
                  %p664 = scmp.ge.s32.totalorder %s663, %s637
                  %s665 = scalar_select %p664, 0, %s663
                  %s666 = smul.u32 %s665, 64
                  %s667 = smul.u32 %s665, 64
                  %s668 = scalar_lea.vmem %s557, %s666 [#allocation2]
                  %s669 = scalar_lea.vmem %s568, %s667
                $region79: #{layer_base_forward.1} parent=73 // loop_footer
                  %s641 = sadd.s32 %s639, 1
                $region80: #{layer_base_forward.1} parent=73 // loop_footer_branch
                  %638 = sbr.rel target = $region76
                $region81: #{layer_base_forward.1} parent=73 // loop_exit
                  _
                %s670 = sshrl.u32 %s564, 3
                %s671 = sand.u32 %s564, 7
                %s672 = smul.u32 %s670, 8
                %s673 = smul.u32 8, %s672
                %s674 = scalar_lea.vmem %s557, %s673 [#allocation2]
                %s675 = smul.u32 8, %s672
                %s676 = scalar_lea.vmem %s568, %s675
                // While loop
                $region82: #{layer_base_forward.1} parent=73 // loop_pre_header
                  _
                $region83: #{layer_base_forward.1} parent=73 // loop_header
                  %s678 = sphi 0, %s680
                  %p679 = scmp.ge.s32.totalorder %s678, %s671
                  %s683 = sphi 0, %s690
                  %s684 = sphi %s674, %s693
                  %s685 = sphi %s676, %s694
                $region84: #{layer_base_forward.1} parent=73 // loop_header_branch
                  %682 = sbr.rel (%p679) target = $region88
                $region85: #{layer_base_forward.1} parent=73 // loop_body
                  %v686 = vld [vmem:[%s684] sm:$0xff]
                  %687 = vst [vmem:[%s685] sm:$0xff] %v686
                  %s688 = sadd.s32 1, %s683
                  %p689 = scmp.ge.s32.totalorder %s688, %s671
                  %s690 = scalar_select %p689, 0, %s688
                  %s691 = smul.u32 %s690, 8
                  %s692 = smul.u32 %s690, 8
                  %s693 = scalar_lea.vmem %s674, %s691 [#allocation2]
                  %s694 = scalar_lea.vmem %s676, %s692
                $region86: #{layer_base_forward.1} parent=73 // loop_footer
                  %s680 = sadd.s32 %s678, 1
                $region87: #{layer_base_forward.1} parent=73 // loop_footer_branch
                  %677 = sbr.rel target = $region83
                $region88: #{layer_base_forward.1} parent=73 // loop_exit
                  _
              $region74: #{layer_base_forward.1} parent=51 // pred_fallthru
                _
              // Predicated region
              $region89: #{layer_base_forward.1} parent=51 // pred_check
                _
              $region90: #{layer_base_forward.1} parent=51 // pred_check_branch
                %696 = sbr.rel target = $region92
              $region91: #{layer_base_forward.1} parent=51 // pred_region
                _
              $region92: #{layer_base_forward.1} parent=51 // pred_fallthru
                _
            $region52: #{layer_base_forward.1} parent=47 // pred_fallthru
              _
            // Predicated region
            $region53: #{layer_base_forward.1} parent=47 // pred_check
              _
            $region54: #{layer_base_forward.1} parent=47 // pred_check_branch
              %575 = sbr.rel target = $region56
            $region55: #{layer_base_forward.1} parent=47 // pred_region
              %s577 = sshrl.u32 %s564, 3
              // While loop
              $region57: #{layer_base_forward.1} parent=55 // loop_pre_header
                _
              $region58: #{layer_base_forward.1} parent=55 // loop_header
                %s579 = sphi 0, %s581
                %p580 = scmp.ge.s32.totalorder %s579, %s577
                %s584 = sphi 0, %s605
                %s585 = sphi %s557, %s608
                %s586 = sphi %s568, %s609
              $region59: #{layer_base_forward.1} parent=55 // loop_header_branch
                %583 = sbr.rel (%p580) target = $region63
              $region60: #{layer_base_forward.1} parent=55 // loop_body
                %v587 = vld [vmem:[%s585] sm:$0xff]
                %588 = vst [vmem:[%s586] sm:$0xff] %v587
                %v589 = vld [vmem:[%s585 + $0x8] sm:$0xff]
                %590 = vst [vmem:[%s586 + $0x8] sm:$0xff] %v589
                %v591 = vld [vmem:[%s585 + $0x10] sm:$0xff]
                %592 = vst [vmem:[%s586 + $0x10] sm:$0xff] %v591
                %v593 = vld [vmem:[%s585 + $0x18] sm:$0xff]
                %594 = vst [vmem:[%s586 + $0x18] sm:$0xff] %v593
                %v595 = vld [vmem:[%s585 + $0x20] sm:$0xff]
                %596 = vst [vmem:[%s586 + $0x20] sm:$0xff] %v595
                %v597 = vld [vmem:[%s585 + $0x28] sm:$0xff]
                %598 = vst [vmem:[%s586 + $0x28] sm:$0xff] %v597
                %v599 = vld [vmem:[%s585 + $0x30] sm:$0xff]
                %600 = vst [vmem:[%s586 + $0x30] sm:$0xff] %v599
                %v601 = vld [vmem:[%s585 + $0x38] sm:$0xff]
                %602 = vst [vmem:[%s586 + $0x38] sm:$0xff] %v601
                %s603 = sadd.s32 1, %s584
                %p604 = scmp.ge.s32.totalorder %s603, %s577
                %s605 = scalar_select %p604, 0, %s603
                %s606 = smul.u32 %s605, 64
                %s607 = smul.u32 %s605, 64
                %s608 = scalar_lea.vmem %s557, %s606 [#allocation2]
                %s609 = scalar_lea.vmem %s568, %s607
              $region61: #{layer_base_forward.1} parent=55 // loop_footer
                %s581 = sadd.s32 %s579, 1
              $region62: #{layer_base_forward.1} parent=55 // loop_footer_branch
                %578 = sbr.rel target = $region58
              $region63: #{layer_base_forward.1} parent=55 // loop_exit
                _
              %s610 = sshrl.u32 %s564, 3
              %s611 = sand.u32 %s564, 7
              %s612 = smul.u32 %s610, 8
              %s613 = smul.u32 8, %s612
              %s614 = scalar_lea.vmem %s557, %s613 [#allocation2]
              %s615 = smul.u32 8, %s612
              %s616 = scalar_lea.vmem %s568, %s615
              // While loop
              $region64: #{layer_base_forward.1} parent=55 // loop_pre_header
                _
              $region65: #{layer_base_forward.1} parent=55 // loop_header
                %s618 = sphi 0, %s620
                %p619 = scmp.ge.s32.totalorder %s618, %s611
                %s623 = sphi 0, %s630
                %s624 = sphi %s614, %s633
                %s625 = sphi %s616, %s634
              $region66: #{layer_base_forward.1} parent=55 // loop_header_branch
                %622 = sbr.rel (%p619) target = $region70
              $region67: #{layer_base_forward.1} parent=55 // loop_body
                %v626 = vld [vmem:[%s624] sm:$0xff]
                %627 = vst [vmem:[%s625] sm:$0xff] %v626
                %s628 = sadd.s32 1, %s623
                %p629 = scmp.ge.s32.totalorder %s628, %s611
                %s630 = scalar_select %p629, 0, %s628
                %s631 = smul.u32 %s630, 8
                %s632 = smul.u32 %s630, 8
                %s633 = scalar_lea.vmem %s614, %s631 [#allocation2]
                %s634 = scalar_lea.vmem %s616, %s632
              $region68: #{layer_base_forward.1} parent=55 // loop_footer
                %s620 = sadd.s32 %s618, 1
              $region69: #{layer_base_forward.1} parent=55 // loop_footer_branch
                %617 = sbr.rel target = $region65
              $region70: #{layer_base_forward.1} parent=55 // loop_exit
                _
            $region56: #{layer_base_forward.1} parent=47 // pred_fallthru
              _
          $region48: #{layer_base_forward.1} parent=43 // pred_fallthru
            _
          %697 = vnop
        $region44: #{layer_base_forward.1} parent=39 // pred_fallthru
          _
      $region40: #{layer_base_forward.1} parent=5 // pred_fallthru
        _
      %p698 = scmp.le.s32.totalorder 2, %s11
      // Predicated region
      $region93: #{layer_base_forward.1} parent=5 // pred_check
        %p699 = pneg %p698
      $region94: #{layer_base_forward.1} parent=5 // pred_check_branch
        %701 = sbr.rel (%p699) target = $region96
      $region95: #{layer_base_forward.1} parent=5 // pred_region
        %s702 = ssub.s32 %s11, 2
        // Predicated region
        $region97: #{layer_base_forward.1} parent=95 // pred_check
          %p703 = pneg %p150
        $region98: #{layer_base_forward.1} parent=95 // pred_check_branch
          %705 = sbr.rel (%p703) target = $region100
        $region99: #{layer_base_forward.1} parent=95 // pred_region
          %s706 = sand.u32 %s135, 1
          %s707 = sand.u32 %s135, 1
          %s708 = smul.addr %s707, 64
          %s709 = scalar_lea.vmem [#allocation2], %s708
        $region100: #{layer_base_forward.1} parent=95 // pred_fallthru
          _
      $region96: #{layer_base_forward.1} parent=5 // pred_fallthru
        _
    $region6: #{layer_base_forward.1} parent=1 // loop_footer
      %s15 = sadd.s32 1, %s11
    $region7: #{layer_base_forward.1} parent=1 // loop_footer_branch
      %10 = sbr.rel target = $region3
    $region8: #{layer_base_forward.1} parent=1 // loop_exit
      _

</llo_original>
